<compile_context>
chip_gen: v7x
topology: tpu7x:2x2x1
jax: 0.10.0
libtpu: 0.0.40
codegen_flags: <defaults>
</compile_context>

<pallas_src>
import functools

import jax
import jax.numpy as jnp
from jax.experimental import pallas as pl
from jax.experimental.pallas import tpu as pltpu


# ---------------------------------------------------------------------------
# Fused kernel: bilinear 2x upsample (parity-factored) + ReLU + 1x1-conv GEMM
#               (bf16 -> f32) + per-image per-channel partial statistics.
# One image per grid step; pixels are flattened h*W + w on the lane axis.
# ---------------------------------------------------------------------------
def _fused_upsample_relu_conv_stats_kernel(
    x_ref, w_ref, wpos_ref, y_ref, stats_ref, shift_ref, r_ref, *, H, W):
    """Refs:
      x_ref:     (1, C_in, H*W)     f32   original image (pixels on lanes)
      w_ref:     (C_out, C_in)      bf16  1x1-conv weight
      wpos_ref:  (1, H*W)           i32   column index (w) of each flattened pixel
      y_ref:     (1, 4, C_out, H*W) bf16  conv output for the 4 upsample parities
      stats_ref: (1, C_out, 2)      f32   per-image [sum, sum-of-squares] per channel
      shift_ref, r_ref: (C_in, H*W) f32   VMEM scratch for clamped +/-1 shifts
    """
    HW = H * W
    c_out = w_ref.shape[0]

    x_view = x_ref.at[0]                       # (C_in, HW) ref view (no load)
    xt = x_view[...]                           # (C_in, HW) f32
    wv = w_ref[...]                            # (C_out, C_in) bf16
    wpos = wpos_ref[...]                       # (1, HW) i32
    at_first_col = wpos == 0
    at_last_col = wpos == (W - 1)

    # ---- row parity 0: 0.75*x[h] + 0.25*x[h-1]   (clamped at h = 0) ----
    shift_ref[:, pl.ds(0, W)] = x_view[:, pl.ds(0, W)]                 # row 0 <- row 0
    shift_ref[:, pl.ds(W, HW - W)] = x_view[:, pl.ds(0, HW - W)]       # row h <- row h-1
    r0 = 0.75 * xt + 0.25 * shift_ref[...]

    # ---- row parity 1: 0.75*x[h] + 0.25*x[h+1]   (clamped at h = H-1) ----
    shift_ref[:, pl.ds(0, HW - W)] = x_view[:, pl.ds(W, HW - W)]       # row h <- row h+1
    shift_ref[:, pl.ds(HW - W, W)] = x_view[:, pl.ds(HW - W, W)]       # row H-1 <- row H-1
    r1 = 0.75 * xt + 0.25 * shift_ref[...]

    y_view = y_ref.at[0]                       # (4, C_out, HW)
    stats_view = stats_ref.at[0]               # (C_out, 2)

    s1 = jnp.zeros((c_out, 1), jnp.float32)
    s2 = jnp.zeros((c_out, 1), jnp.float32)
    for ph, r in ((0, r0), (1, r1)):
        r_ref[...] = r
        # column neighbour w-1 (global 1-lane shift, per-row clamp fixed by mask)
        shift_ref[:, pl.ds(1, HW - 1)] = r_ref[:, pl.ds(0, HW - 1)]
        shift_ref[:, pl.ds(0, 1)] = r_ref[:, pl.ds(0, 1)]
        r_wm = jnp.where(at_first_col, r, shift_ref[...])
        # column neighbour w+1 (clamped at w = W-1)
        shift_ref[:, pl.ds(0, HW - 1)] = r_ref[:, pl.ds(1, HW - 1)]
        shift_ref[:, pl.ds(HW - 1, 1)] = r_ref[:, pl.ds(HW - 1, 1)]
        r_wp = jnp.where(at_last_col, r, shift_ref[...])

        for pw, u in ((0, 0.75 * r + 0.25 * r_wm), (1, 0.75 * r + 0.25 * r_wp)):
            rhs = jnp.maximum(u, 0.0).astype(jnp.bfloat16)             # ReLU, bf16 MXU op
            y = jnp.dot(wv, rhs, preferred_element_type=jnp.float32)   # (C_out, HW) f32
            y_view[2 * ph + pw] = y.astype(jnp.bfloat16)               # lane-dense bf16 store
            s1 = s1 + jnp.sum(y, axis=1, keepdims=True)                # stats from f32 acc
            s2 = s2 + jnp.sum(y * y, axis=1, keepdims=True)

    stats_view[:, pl.ds(0, 1)] = s1
    stats_view[:, pl.ds(1, 1)] = s2


@functools.partial(jax.jit, static_argnames=("eps",))
def factorized_increase(x, weight, bias, gamma, beta, *, eps=1e-5):
    """Upsample(2x bilinear) -> ReLU -> Conv2d(C_in, C_out, 1) -> BatchNorm2d (train).

    x:      [N, C_in, H, W]      (NCHW, like PyTorch)
    weight: [C_out, C_in, 1, 1]  (OIHW, like PyTorch)
    bias:   [C_out]              conv bias (cancels exactly under batch-stat BN)
    gamma, beta: [C_out]         BatchNorm affine parameters
    returns [N, C_out, 2H, 2W] float32
    """
    del bias  # shifts y and the batch mean identically -> cancels in (y - mean)

    N, C_in, H, W = x.shape
    C_out = weight.shape[0]
    HW = H * W
    M = 4 * N * HW                                  # upsampled pixel count

    x3 = x.astype(jnp.float32).reshape(N, C_in, HW)             # free view
    w_mat = weight.reshape(C_out, C_in).astype(jnp.bfloat16)
    wpos = (jnp.arange(HW, dtype=jnp.int32) % W).reshape(1, HW)  # column index per pixel

    kernel = functools.partial(_fused_upsample_relu_conv_stats_kernel, H=H, W=W)

    y, stats = pl.pallas_call(
        kernel,
        grid=(N,),
        in_specs=[
            pl.BlockSpec((1, C_in, HW), lambda n: (n, 0, 0)),
            pl.BlockSpec((C_out, C_in), lambda n: (0, 0)),
            pl.BlockSpec((1, HW), lambda n: (0, 0)),
        ],
        out_specs=(
            pl.BlockSpec((1, 4, C_out, HW), lambda n: (n, 0, 0, 0)),   # bf16 y, lane-dense
            pl.BlockSpec((1, C_out, 2), lambda n: (n, 0, 0)),          # merged partial stats
        ),
        out_shape=(
            jax.ShapeDtypeStruct((N, 4, C_out, HW), jnp.bfloat16),
            jax.ShapeDtypeStruct((N, C_out, 2), jnp.float32),
        ),
        scratch_shapes=[
            pltpu.VMEM((C_in, HW), jnp.float32),     # shifted-neighbour assembly buffer
            pltpu.VMEM((C_in, HW), jnp.float32),     # current row-parity r
        ],
        compiler_params=pltpu.CompilerParams(
            dimension_semantics=("parallel",)),      # megacore split over images (v7x)
        cost_estimate=pl.CostEstimate(
            flops=2 * M * C_in * C_out + 12 * (M // 4) * C_in + 4 * M * C_out,
            transcendentals=0,
            bytes_accessed=(N * C_in * HW * 4 + C_out * C_in * 2
                            + M * C_out * 2 + N * C_out * 2 * 4 + N * HW * 4),
        ),
    )(x3, w_mat, wpos)

    # ---- tiny host-side fold: batch statistics -> per-channel scale / shift ----
    tot = jnp.sum(stats, axis=0)                     # [C_out, 2]
    mean = tot[:, 0] / M
    var = jnp.maximum(tot[:, 1] / M - mean * mean, 0.0)   # clamp cancellation
    inv = jax.lax.rsqrt(var + eps)
    scale = gamma.astype(jnp.float32) * inv
    shift = beta.astype(jnp.float32) - mean * scale

    # ---- BN affine fused by XLA into the mandatory un-permute copy back to NCHW ----
    out = y.astype(jnp.float32) * scale[None, None, :, None] + shift[None, None, :, None]
    out = out.reshape(N, 2, 2, C_out, H, W)          # (n, ph, pw, c, h, w)
    out = jnp.transpose(out, (0, 3, 4, 1, 5, 2))     # (n, c, h, ph, w, pw)
    return out.reshape(N, C_out, 2 * H, 2 * W)


# ---------------------------------------------------------------------------
# References
# ---------------------------------------------------------------------------
def _bilinear2x_parity(x):
    """x: [N, C, H, W] -> u: [2(ph), 2(pw), N, C, H, W] (parity-factored bilinear 2x)."""
    xm = jnp.concatenate([x[:, :, :1, :], x[:, :, :-1, :]], axis=2)     # row h-1 (clamped)
    xp = jnp.concatenate([x[:, :, 1:, :], x[:, :, -1:, :]], axis=2)     # row h+1 (clamped)
    r = jnp.stack([0.75 * x + 0.25 * xm, 0.75 * x + 0.25 * xp], axis=0)
    rm = jnp.concatenate([r[..., :1], r[..., :-1]], axis=-1)            # col w-1 (clamped)
    rp = jnp.concatenate([r[..., 1:], r[..., -1:]], axis=-1)            # col w+1 (clamped)
    return jnp.stack([0.75 * r + 0.25 * rm, 0.75 * r + 0.25 * rp], axis=1)


def _bilinear2x_nchw(x):
    N, C, H, W = x.shape
    u = _bilinear2x_parity(x)                       # [ph, pw, N, C, H, W]
    u = jnp.transpose(u, (2, 3, 4, 0, 5, 1))        # [N, C, H, ph, W, pw]
    return u.reshape(N, C, 2 * H, 2 * W)


def _upsample_bilinear2x_gather(x):
    """Direct PyTorch formula (align_corners=False): independent check."""
    N, C, H, W = x.shape

    def src(out_size, in_size):
        s = (jnp.arange(out_size, dtype=jnp.float32) + 0.5) * 0.5 - 0.5
        s = jnp.maximum(s, 0.0)
        i0 = jnp.floor(s).astype(jnp.int32)
        frac = s - i0.astype(jnp.float32)
        i1 = jnp.minimum(i0 + 1, in_size - 1)
        return i0, i1, frac

    h0, h1, fh = src(2 * H, H)
    w0, w1, fw = src(2 * W, W)
    xr = (x[:, :, h0, :] * (1.0 - fh)[None, None, :, None]
          + x[:, :, h1, :] * fh[None, None, :, None])
    return xr[:, :, :, w0] * (1.0 - fw) + xr[:, :, :, w1] * fw


def _reference(x, weight, bias, gamma, beta, *, eps=1e-5,
               upsample_fn=_upsample_bilinear2x_gather,
               matmul_dtype=jnp.float32, y_store_dtype=jnp.float32):
    """Pure-JAX replica of the PyTorch forward (training-mode BatchNorm)."""
    up = upsample_fn(x)
    h = jnp.maximum(up, 0.0)
    w2 = weight.reshape(weight.shape[0], weight.shape[1])
    hm = h.astype(matmul_dtype).astype(jnp.float32)
    wm = w2.astype(matmul_dtype).astype(jnp.float32)
    y = jnp.einsum("nchw,oc->nohw", hm, wm) + bias.reshape(1, -1, 1, 1)
    mean = y.mean(axis=(0, 2, 3), keepdims=True)
    var = y.var(axis=(0, 2, 3), keepdims=True)      # biased, as BN uses for normalization
    yq = y.astype(y_store_dtype).astype(jnp.float32)
    y_hat = (yq - mean) * jax.lax.rsqrt(var + eps)
    return y_hat * gamma.reshape(1, -1, 1, 1) + beta.reshape(1, -1, 1, 1)


if __name__ == "__main__":
    N, C_in, C_out, H, W = 2, 4, 8, 16, 16

    key = jax.random.PRNGKey(0)
    kx, kw, kb, kg, kbt = jax.random.split(key, 5)
    x = jax.random.normal(kx, (N, C_in, H, W), dtype=jnp.float32)
    weight = jax.random.normal(kw, (C_out, C_in, 1, 1), dtype=jnp.float32) * 0.1
    bias = jax.random.normal(kb, (C_out,), dtype=jnp.float32) * 0.1
    gamma = 1.0 + 0.1 * jax.random.normal(kg, (C_out,), dtype=jnp.float32)
    beta = 0.1 * jax.random.normal(kbt, (C_out,), dtype=jnp.float32)

    out = factorized_increase(x, weight, bias, gamma, beta)
    out = jax.block_until_ready(out)
    assert out.shape == (N, C_out, 2 * H, 2 * W)

    # Tight check: mirrors kernel numerics (parity-factored upsample, bf16 matmul
    # operands, bf16 y storage, conv bias omitted since it cancels under batch-stat BN).
    ref_tight = _reference(x, weight, jnp.zeros_like(bias), gamma, beta,
                           upsample_fn=_bilinear2x_nchw,
                           matmul_dtype=jnp.bfloat16, y_store_dtype=jnp.bfloat16)
    err_tight = float(jnp.max(jnp.abs(out - ref_tight)))
    assert err_tight < 2e-2, f"tight check failed: {err_tight}"

    # Loose check: fully-independent f32 PyTorch-formula reference (with the conv bias),
    # bounding the bf16 matmul + bf16 y-storage rounding on a unit-variance BN output.
    ref_loose = _reference(x, weight, bias, gamma, beta)
    err_loose = float(jnp.max(jnp.abs(out - ref_loose)))
    assert err_loose < 1e-1, f"loose check failed: {err_loose}"

    print("KERNEL_OK")
</pallas_src>

<mosaic_0001>
module attributes {stable_mosaic.version = 11 : i64} {
  func.func @_fused_upsample_relu_conv_stats_kernel(%arg0: i32, %arg1: memref<1x4x256xf32, #tpu.memory_space<vmem>>, %arg2: memref<8x4xbf16, #tpu.memory_space<vmem>>, %arg3: memref<1x256xi32, #tpu.memory_space<vmem>>, %arg4: memref<1x4x8x256xbf16, #tpu.memory_space<vmem>>, %arg5: memref<1x8x2xf32, #tpu.memory_space<vmem>>, %arg6: memref<4x256xf32, #tpu.memory_space<vmem>>, %arg7: memref<4x256xf32, #tpu.memory_space<vmem>>) attributes {dimension_semantics = [#tpu.dimension_semantics<parallel>], iteration_bounds = array<i64: 2>, scalar_prefetch = 0 : i64, scratch_operands = 2 : i64, tpu.core_type = #tpu.core_type<tc>, window_params = [{transform_indices = @transform_0, window_bounds = array<i64: 1, 4, 256>}, {pipeline_mode = #tpu.pipeline_mode<synchronous>, transform_indices = @transform_1, window_bounds = array<i64: 8, 4>}, {pipeline_mode = #tpu.pipeline_mode<synchronous>, transform_indices = @transform_2, window_bounds = array<i64: 1, 256>}, {transform_indices = @transform_3, window_bounds = array<i64: 1, 4, 8, 256>}, {transform_indices = @transform_4, window_bounds = array<i64: 1, 8, 2>}]} {
    %c0 = arith.constant 0 : index
    %c0_0 = arith.constant 0 : index
    %c0_1 = arith.constant 0 : index
    %0 = vector.load %arg1[%c0, %c0_0, %c0_1] : memref<1x4x256xf32, #tpu.memory_space<vmem>>, vector<1x4x256xf32>
    %1 = vector.shape_cast %0 : vector<1x4x256xf32> to vector<4x256xf32>
    %c0_2 = arith.constant 0 : index
    %c0_3 = arith.constant 0 : index
    %2 = vector.load %arg2[%c0_2, %c0_3] : memref<8x4xbf16, #tpu.memory_space<vmem>>, vector<8x4xbf16>
    %c0_4 = arith.constant 0 : index
    %c0_5 = arith.constant 0 : index
    %3 = vector.load %arg3[%c0_4, %c0_5] : memref<1x256xi32, #tpu.memory_space<vmem>>, vector<1x256xi32>
    %c0_i32 = arith.constant 0 : i32
    %4 = vector.broadcast %c0_i32 : i32 to vector<1x256xi32>
    %5 = arith.cmpi eq, %3, %4 : vector<1x256xi32>
    %c15_i32 = arith.constant 15 : i32
    %6 = vector.broadcast %c15_i32 : i32 to vector<1x256xi32>
    %7 = arith.cmpi eq, %3, %6 : vector<1x256xi32>
    %c0_i32_6 = arith.constant 0 : i32
    %c0_i32_7 = arith.constant 0 : i32
    %c0_i32_8 = arith.constant 0 : i32
    %8 = tpu.memref_slice %arg1[%c0_i32_6, %c0_i32_7, %c0_i32_8] : memref<1x4x256xf32, #tpu.memory_space<vmem>> -> memref<1x4x256xf32, #tpu.memory_space<vmem>>
    %9 = tpu.memref_squeeze %8 : memref<1x4x256xf32, #tpu.memory_space<vmem>> -> memref<4x256xf32, #tpu.memory_space<vmem>>
    %c0_9 = arith.constant 0 : index
    %c0_10 = arith.constant 0 : index
    %10 = vector.load %9[%c0_9, %c0_10] : memref<4x256xf32, #tpu.memory_space<vmem>>, vector<4x16xf32>
    %c0_11 = arith.constant 0 : index
    %c0_12 = arith.constant 0 : index
    %11 = vector.load %arg6[%c0_11, %c0_12] : memref<4x256xf32, #tpu.memory_space<vmem>>, vector<4x16xf32>
    tpu.vector_store %arg6[%c0_11, %c0_12], %10 {strides = array<i32>} : memref<4x256xf32, #tpu.memory_space<vmem>>, vector<4x16xf32>,
    %c0_i32_13 = arith.constant 0 : i32
    %c0_i32_14 = arith.constant 0 : i32
    %c0_i32_15 = arith.constant 0 : i32
    %12 = tpu.memref_slice %arg1[%c0_i32_13, %c0_i32_14, %c0_i32_15] : memref<1x4x256xf32, #tpu.memory_space<vmem>> -> memref<1x4x256xf32, #tpu.memory_space<vmem>>
    %13 = tpu.memref_squeeze %12 : memref<1x4x256xf32, #tpu.memory_space<vmem>> -> memref<4x256xf32, #tpu.memory_space<vmem>>
    %c0_16 = arith.constant 0 : index
    %c0_17 = arith.constant 0 : index
    %14 = vector.load %13[%c0_16, %c0_17] : memref<4x256xf32, #tpu.memory_space<vmem>>, vector<4x240xf32>
    %c0_18 = arith.constant 0 : index
    %c16 = arith.constant 16 : index
    %15 = vector.load %arg6[%c0_18, %c16] : memref<4x256xf32, #tpu.memory_space<vmem>>, vector<4x240xf32>
    tpu.vector_store %arg6[%c0_18, %c16], %14 {strides = array<i32>} : memref<4x256xf32, #tpu.memory_space<vmem>>, vector<4x240xf32>,
    %cst = arith.constant 7.500000e-01 : f32
    %16 = vector.broadcast %cst : f32 to vector<4x256xf32>
    %17 = arith.mulf %16, %1 : vector<4x256xf32>
    %c0_19 = arith.constant 0 : index
    %c0_20 = arith.constant 0 : index
    %18 = vector.load %arg6[%c0_19, %c0_20] : memref<4x256xf32, #tpu.memory_space<vmem>>, vector<4x256xf32>
    %cst_21 = arith.constant 2.500000e-01 : f32
    %19 = vector.broadcast %cst_21 : f32 to vector<4x256xf32>
    %20 = arith.mulf %19, %18 : vector<4x256xf32>
    %21 = arith.addf %17, %20 : vector<4x256xf32>
    %c0_i32_22 = arith.constant 0 : i32
    %c0_i32_23 = arith.constant 0 : i32
    %c0_i32_24 = arith.constant 0 : i32
    %22 = tpu.memref_slice %arg1[%c0_i32_22, %c0_i32_23, %c0_i32_24] : memref<1x4x256xf32, #tpu.memory_space<vmem>> -> memref<1x4x256xf32, #tpu.memory_space<vmem>>
    %23 = tpu.memref_squeeze %22 : memref<1x4x256xf32, #tpu.memory_space<vmem>> -> memref<4x256xf32, #tpu.memory_space<vmem>>
    %c0_25 = arith.constant 0 : index
    %c16_26 = arith.constant 16 : index
    %24 = vector.load %23[%c0_25, %c16_26] : memref<4x256xf32, #tpu.memory_space<vmem>>, vector<4x240xf32>
    %c0_27 = arith.constant 0 : index
    %c0_28 = arith.constant 0 : index
    %25 = vector.load %arg6[%c0_27, %c0_28] : memref<4x256xf32, #tpu.memory_space<vmem>>, vector<4x240xf32>
    tpu.vector_store %arg6[%c0_27, %c0_28], %24 {strides = array<i32>} : memref<4x256xf32, #tpu.memory_space<vmem>>, vector<4x240xf32>,
    %c0_i32_29 = arith.constant 0 : i32
    %c0_i32_30 = arith.constant 0 : i32
    %c0_i32_31 = arith.constant 0 : i32
    %26 = tpu.memref_slice %arg1[%c0_i32_29, %c0_i32_30, %c0_i32_31] : memref<1x4x256xf32, #tpu.memory_space<vmem>> -> memref<1x4x256xf32, #tpu.memory_space<vmem>>
    %27 = tpu.memref_squeeze %26 : memref<1x4x256xf32, #tpu.memory_space<vmem>> -> memref<4x256xf32, #tpu.memory_space<vmem>>
    %c0_32 = arith.constant 0 : index
    %c240 = arith.constant 240 : index
    %28 = vector.load %27[%c0_32, %c240] : memref<4x256xf32, #tpu.memory_space<vmem>>, vector<4x16xf32>
    %c0_33 = arith.constant 0 : index
    %c240_34 = arith.constant 240 : index
    %29 = vector.load %arg6[%c0_33, %c240_34] : memref<4x256xf32, #tpu.memory_space<vmem>>, vector<4x16xf32>
    tpu.vector_store %arg6[%c0_33, %c240_34], %28 {strides = array<i32>} : memref<4x256xf32, #tpu.memory_space<vmem>>, vector<4x16xf32>,
    %cst_35 = arith.constant 7.500000e-01 : f32
    %30 = vector.broadcast %cst_35 : f32 to vector<4x256xf32>
    %31 = arith.mulf %30, %1 : vector<4x256xf32>
    %c0_36 = arith.constant 0 : index
    %c0_37 = arith.constant 0 : index
    %32 = vector.load %arg6[%c0_36, %c0_37] : memref<4x256xf32, #tpu.memory_space<vmem>>, vector<4x256xf32>
    %cst_38 = arith.constant 2.500000e-01 : f32
    %33 = vector.broadcast %cst_38 : f32 to vector<4x256xf32>
    %34 = arith.mulf %33, %32 : vector<4x256xf32>
    %35 = arith.addf %31, %34 : vector<4x256xf32>
    %cst_39 = arith.constant 0.000000e+00 : f32
    %36 = vector.broadcast %cst_39 : f32 to vector<8x1xf32>
    %cst_40 = arith.constant 0.000000e+00 : f32
    %37 = vector.broadcast %cst_40 : f32 to vector<8x1xf32>
    %c0_41 = arith.constant 0 : index
    %c0_42 = arith.constant 0 : index
    %38 = vector.load %arg7[%c0_41, %c0_42] : memref<4x256xf32, #tpu.memory_space<vmem>>, vector<4x256xf32>
    tpu.vector_store %arg7[%c0_41, %c0_42], %21 {strides = array<i32>} : memref<4x256xf32, #tpu.memory_space<vmem>>, vector<4x256xf32>,
    %c0_43 = arith.constant 0 : index
    %c0_44 = arith.constant 0 : index
    %39 = vector.load %arg7[%c0_43, %c0_44] : memref<4x256xf32, #tpu.memory_space<vmem>>, vector<4x255xf32>
    %c0_45 = arith.constant 0 : index
    %c1 = arith.constant 1 : index
    %40 = vector.load %arg6[%c0_45, %c1] : memref<4x256xf32, #tpu.memory_space<vmem>>, vector<4x255xf32>
    tpu.vector_store %arg6[%c0_45, %c1], %39 {strides = array<i32>} : memref<4x256xf32, #tpu.memory_space<vmem>>, vector<4x255xf32>,
    %c0_46 = arith.constant 0 : index
    %c0_47 = arith.constant 0 : index
    %41 = vector.load %arg7[%c0_46, %c0_47] : memref<4x256xf32, #tpu.memory_space<vmem>>, vector<4x1xf32>
    %c0_48 = arith.constant 0 : index
    %c0_49 = arith.constant 0 : index
    %42 = vector.load %arg6[%c0_48, %c0_49] : memref<4x256xf32, #tpu.memory_space<vmem>>, vector<4x1xf32>
    tpu.vector_store %arg6[%c0_48, %c0_49], %41 {strides = array<i32>} : memref<4x256xf32, #tpu.memory_space<vmem>>, vector<4x1xf32>,
    %c0_50 = arith.constant 0 : index
    %c0_51 = arith.constant 0 : index
    %43 = vector.load %arg6[%c0_50, %c0_51] : memref<4x256xf32, #tpu.memory_space<vmem>>, vector<4x256xf32>
    %44 = vector.shape_cast %5 : vector<1x256xi1> to vector<1x256xi1>
    %45 = vector.broadcast %44 : vector<1x256xi1> to vector<4x256xi1>
    %46 = arith.select %45, %21, %43 : vector<4x256xi1>, vector<4x256xf32>
    %c0_52 = arith.constant 0 : index
    %c1_53 = arith.constant 1 : index
    %47 = vector.load %arg7[%c0_52, %c1_53] : memref<4x256xf32, #tpu.memory_space<vmem>>, vector<4x255xf32>
    %c0_54 = arith.constant 0 : index
    %c0_55 = arith.constant 0 : index
    %48 = vector.load %arg6[%c0_54, %c0_55] : memref<4x256xf32, #tpu.memory_space<vmem>>, vector<4x255xf32>
    tpu.vector_store %arg6[%c0_54, %c0_55], %47 {strides = array<i32>} : memref<4x256xf32, #tpu.memory_space<vmem>>, vector<4x255xf32>,
    %c0_56 = arith.constant 0 : index
    %c255 = arith.constant 255 : index
    %49 = vector.load %arg7[%c0_56, %c255] : memref<4x256xf32, #tpu.memory_space<vmem>>, vector<4x1xf32>
    %c0_57 = arith.constant 0 : index
    %c255_58 = arith.constant 255 : index
    %50 = vector.load %arg6[%c0_57, %c255_58] : memref<4x256xf32, #tpu.memory_space<vmem>>, vector<4x1xf32>
    tpu.vector_store %arg6[%c0_57, %c255_58], %49 {strides = array<i32>} : memref<4x256xf32, #tpu.memory_space<vmem>>, vector<4x1xf32>,
    %c0_59 = arith.constant 0 : index
    %c0_60 = arith.constant 0 : index
    %51 = vector.load %arg6[%c0_59, %c0_60] : memref<4x256xf32, #tpu.memory_space<vmem>>, vector<4x256xf32>
    %52 = vector.shape_cast %7 : vector<1x256xi1> to vector<1x256xi1>
    %53 = vector.broadcast %52 : vector<1x256xi1> to vector<4x256xi1>
    %54 = arith.select %53, %21, %51 : vector<4x256xi1>, vector<4x256xf32>
    %cst_61 = arith.constant 7.500000e-01 : f32
    %55 = vector.broadcast %cst_61 : f32 to vector<4x256xf32>
    %56 = arith.mulf %55, %21 : vector<4x256xf32>
    %cst_62 = arith.constant 2.500000e-01 : f32
    %57 = vector.broadcast %cst_62 : f32 to vector<4x256xf32>
    %58 = arith.mulf %57, %46 : vector<4x256xf32>
    %59 = arith.addf %56, %58 : vector<4x256xf32>
    %cst_63 = arith.constant 7.500000e-01 : f32
    %60 = vector.broadcast %cst_63 : f32 to vector<4x256xf32>
    %61 = arith.mulf %60, %21 : vector<4x256xf32>
    %cst_64 = arith.constant 2.500000e-01 : f32
    %62 = vector.broadcast %cst_64 : f32 to vector<4x256xf32>
    %63 = arith.mulf %62, %54 : vector<4x256xf32>
    %64 = arith.addf %61, %63 : vector<4x256xf32>
    %cst_65 = arith.constant 0.000000e+00 : f32
    %65 = vector.broadcast %cst_65 : f32 to vector<4x256xf32>
    %66 = arith.maximumf %59, %65 : vector<4x256xf32>
    %67 = arith.truncf %66 : vector<4x256xf32> to vector<4x256xbf16>
    %cst_66 = arith.constant dense<0.000000e+00> : vector<8x256xf32>
    %68 = tpu.matmul %2, %67, %cst_66 {dimension_numbers = #tpu.dot_dimension_numbers<[1], [0], [0], [1], [0, 0, 1, 1], [], []>} : vector<8x4xbf16>, vector<4x256xbf16>, vector<8x256xf32> -> vector<8x256xf32>
    %69 = arith.truncf %68 : vector<8x256xf32> to vector<8x256xbf16>
    %c0_i32_67 = arith.constant 0 : i32
    %c0_i32_68 = arith.constant 0 : i32
    %c0_i32_69 = arith.constant 0 : i32
    %c0_i32_70 = arith.constant 0 : i32
    %70 = tpu.memref_slice %arg4[%c0_i32_67, %c0_i32_68, %c0_i32_69, %c0_i32_70] : memref<1x4x8x256xbf16, #tpu.memory_space<vmem>> -> memref<1x4x8x256xbf16, #tpu.memory_space<vmem>>
    %71 = tpu.memref_squeeze %70 : memref<1x4x8x256xbf16, #tpu.memory_space<vmem>> -> memref<4x8x256xbf16, #tpu.memory_space<vmem>>
    %c0_71 = arith.constant 0 : index
    %c0_72 = arith.constant 0 : index
    %c0_73 = arith.constant 0 : index
    %72 = vector.load %71[%c0_71, %c0_72, %c0_73] : memref<4x8x256xbf16, #tpu.memory_space<vmem>>, vector<1x8x256xbf16>
    %73 = vector.shape_cast %72 : vector<1x8x256xbf16> to vector<8x256xbf16>
    %74 = vector.shape_cast %69 : vector<8x256xbf16> to vector<1x8x256xbf16>
    tpu.vector_store %71[%c0_71, %c0_72, %c0_73], %74 {strides = array<i32>} : memref<4x8x256xbf16, #tpu.memory_space<vmem>>, vector<1x8x256xbf16>,
    %cst_74 = arith.constant dense<0.000000e+00> : vector<8xf32>
    %75 = vector.multi_reduction <add>, %68, %cst_74 [1] : vector<8x256xf32> to vector<8xf32>
    %76 = vector.shape_cast %75 : vector<8xf32> to vector<8x1xf32>
    %77 = arith.addf %36, %76 : vector<8x1xf32>
    %78 = arith.mulf %68, %68 : vector<8x256xf32>
    %cst_75 = arith.constant dense<0.000000e+00> : vector<8xf32>
    %79 = vector.multi_reduction <add>, %78, %cst_75 [1] : vector<8x256xf32> to vector<8xf32>
    %80 = vector.shape_cast %79 : vector<8xf32> to vector<8x1xf32>
    %81 = arith.addf %37, %80 : vector<8x1xf32>
    %cst_76 = arith.constant 0.000000e+00 : f32
    %82 = vector.broadcast %cst_76 : f32 to vector<4x256xf32>
    %83 = arith.maximumf %64, %82 : vector<4x256xf32>
    %84 = arith.truncf %83 : vector<4x256xf32> to vector<4x256xbf16>
    %cst_77 = arith.constant dense<0.000000e+00> : vector<8x256xf32>
    %85 = tpu.matmul %2, %84, %cst_77 {dimension_numbers = #tpu.dot_dimension_numbers<[1], [0], [0], [1], [0, 0, 1, 1], [], []>} : vector<8x4xbf16>, vector<4x256xbf16>, vector<8x256xf32> -> vector<8x256xf32>
    %86 = arith.truncf %85 : vector<8x256xf32> to vector<8x256xbf16>
    %c0_i32_78 = arith.constant 0 : i32
    %c0_i32_79 = arith.constant 0 : i32
    %c0_i32_80 = arith.constant 0 : i32
    %c0_i32_81 = arith.constant 0 : i32
    %87 = tpu.memref_slice %arg4[%c0_i32_78, %c0_i32_79, %c0_i32_80, %c0_i32_81] : memref<1x4x8x256xbf16, #tpu.memory_space<vmem>> -> memref<1x4x8x256xbf16, #tpu.memory_space<vmem>>
    %88 = tpu.memref_squeeze %87 : memref<1x4x8x256xbf16, #tpu.memory_space<vmem>> -> memref<4x8x256xbf16, #tpu.memory_space<vmem>>
    %c1_82 = arith.constant 1 : index
    %c0_83 = arith.constant 0 : index
    %c0_84 = arith.constant 0 : index
    %89 = vector.load %88[%c1_82, %c0_83, %c0_84] : memref<4x8x256xbf16, #tpu.memory_space<vmem>>, vector<1x8x256xbf16>
    %90 = vector.shape_cast %89 : vector<1x8x256xbf16> to vector<8x256xbf16>
    %91 = vector.shape_cast %86 : vector<8x256xbf16> to vector<1x8x256xbf16>
    tpu.vector_store %88[%c1_82, %c0_83, %c0_84], %91 {strides = array<i32>} : memref<4x8x256xbf16, #tpu.memory_space<vmem>>, vector<1x8x256xbf16>,
    %cst_85 = arith.constant dense<0.000000e+00> : vector<8xf32>
    %92 = vector.multi_reduction <add>, %85, %cst_85 [1] : vector<8x256xf32> to vector<8xf32>
    %93 = vector.shape_cast %92 : vector<8xf32> to vector<8x1xf32>
    %94 = arith.addf %77, %93 : vector<8x1xf32>
    %95 = arith.mulf %85, %85 : vector<8x256xf32>
    %cst_86 = arith.constant dense<0.000000e+00> : vector<8xf32>
    %96 = vector.multi_reduction <add>, %95, %cst_86 [1] : vector<8x256xf32> to vector<8xf32>
    %97 = vector.shape_cast %96 : vector<8xf32> to vector<8x1xf32>
    %98 = arith.addf %81, %97 : vector<8x1xf32>
    %c0_87 = arith.constant 0 : index
    %c0_88 = arith.constant 0 : index
    %99 = vector.load %arg7[%c0_87, %c0_88] : memref<4x256xf32, #tpu.memory_space<vmem>>, vector<4x256xf32>
    tpu.vector_store %arg7[%c0_87, %c0_88], %35 {strides = array<i32>} : memref<4x256xf32, #tpu.memory_space<vmem>>, vector<4x256xf32>,
    %c0_89 = arith.constant 0 : index
    %c0_90 = arith.constant 0 : index
    %100 = vector.load %arg7[%c0_89, %c0_90] : memref<4x256xf32, #tpu.memory_space<vmem>>, vector<4x255xf32>
    %c0_91 = arith.constant 0 : index
    %c1_92 = arith.constant 1 : index
    %101 = vector.load %arg6[%c0_91, %c1_92] : memref<4x256xf32, #tpu.memory_space<vmem>>, vector<4x255xf32>
    tpu.vector_store %arg6[%c0_91, %c1_92], %100 {strides = array<i32>} : memref<4x256xf32, #tpu.memory_space<vmem>>, vector<4x255xf32>,
    %c0_93 = arith.constant 0 : index
    %c0_94 = arith.constant 0 : index
    %102 = vector.load %arg7[%c0_93, %c0_94] : memref<4x256xf32, #tpu.memory_space<vmem>>, vector<4x1xf32>
    %c0_95 = arith.constant 0 : index
    %c0_96 = arith.constant 0 : index
    %103 = vector.load %arg6[%c0_95, %c0_96] : memref<4x256xf32, #tpu.memory_space<vmem>>, vector<4x1xf32>
    tpu.vector_store %arg6[%c0_95, %c0_96], %102 {strides = array<i32>} : memref<4x256xf32, #tpu.memory_space<vmem>>, vector<4x1xf32>,
    %c0_97 = arith.constant 0 : index
    %c0_98 = arith.constant 0 : index
    %104 = vector.load %arg6[%c0_97, %c0_98] : memref<4x256xf32, #tpu.memory_space<vmem>>, vector<4x256xf32>
    %105 = vector.shape_cast %5 : vector<1x256xi1> to vector<1x256xi1>
    %106 = vector.broadcast %105 : vector<1x256xi1> to vector<4x256xi1>
    %107 = arith.select %106, %35, %104 : vector<4x256xi1>, vector<4x256xf32>
    %c0_99 = arith.constant 0 : index
    %c1_100 = arith.constant 1 : index
    %108 = vector.load %arg7[%c0_99, %c1_100] : memref<4x256xf32, #tpu.memory_space<vmem>>, vector<4x255xf32>
    %c0_101 = arith.constant 0 : index
    %c0_102 = arith.constant 0 : index
    %109 = vector.load %arg6[%c0_101, %c0_102] : memref<4x256xf32, #tpu.memory_space<vmem>>, vector<4x255xf32>
    tpu.vector_store %arg6[%c0_101, %c0_102], %108 {strides = array<i32>} : memref<4x256xf32, #tpu.memory_space<vmem>>, vector<4x255xf32>,
    %c0_103 = arith.constant 0 : index
    %c255_104 = arith.constant 255 : index
    %110 = vector.load %arg7[%c0_103, %c255_104] : memref<4x256xf32, #tpu.memory_space<vmem>>, vector<4x1xf32>
    %c0_105 = arith.constant 0 : index
    %c255_106 = arith.constant 255 : index
    %111 = vector.load %arg6[%c0_105, %c255_106] : memref<4x256xf32, #tpu.memory_space<vmem>>, vector<4x1xf32>
    tpu.vector_store %arg6[%c0_105, %c255_106], %110 {strides = array<i32>} : memref<4x256xf32, #tpu.memory_space<vmem>>, vector<4x1xf32>,
    %c0_107 = arith.constant 0 : index
    %c0_108 = arith.constant 0 : index
    %112 = vector.load %arg6[%c0_107, %c0_108] : memref<4x256xf32, #tpu.memory_space<vmem>>, vector<4x256xf32>
    %113 = vector.shape_cast %7 : vector<1x256xi1> to vector<1x256xi1>
    %114 = vector.broadcast %113 : vector<1x256xi1> to vector<4x256xi1>
    %115 = arith.select %114, %35, %112 : vector<4x256xi1>, vector<4x256xf32>
    %cst_109 = arith.constant 7.500000e-01 : f32
    %116 = vector.broadcast %cst_109 : f32 to vector<4x256xf32>
    %117 = arith.mulf %116, %35 : vector<4x256xf32>
    %cst_110 = arith.constant 2.500000e-01 : f32
    %118 = vector.broadcast %cst_110 : f32 to vector<4x256xf32>
    %119 = arith.mulf %118, %107 : vector<4x256xf32>
    %120 = arith.addf %117, %119 : vector<4x256xf32>
    %cst_111 = arith.constant 7.500000e-01 : f32
    %121 = vector.broadcast %cst_111 : f32 to vector<4x256xf32>
    %122 = arith.mulf %121, %35 : vector<4x256xf32>
    %cst_112 = arith.constant 2.500000e-01 : f32
    %123 = vector.broadcast %cst_112 : f32 to vector<4x256xf32>
    %124 = arith.mulf %123, %115 : vector<4x256xf32>
    %125 = arith.addf %122, %124 : vector<4x256xf32>
    %cst_113 = arith.constant 0.000000e+00 : f32
    %126 = vector.broadcast %cst_113 : f32 to vector<4x256xf32>
    %127 = arith.maximumf %120, %126 : vector<4x256xf32>
    %128 = arith.truncf %127 : vector<4x256xf32> to vector<4x256xbf16>
    %cst_114 = arith.constant dense<0.000000e+00> : vector<8x256xf32>
    %129 = tpu.matmul %2, %128, %cst_114 {dimension_numbers = #tpu.dot_dimension_numbers<[1], [0], [0], [1], [0, 0, 1, 1], [], []>} : vector<8x4xbf16>, vector<4x256xbf16>, vector<8x256xf32> -> vector<8x256xf32>
    %130 = arith.truncf %129 : vector<8x256xf32> to vector<8x256xbf16>
    %c0_i32_115 = arith.constant 0 : i32
    %c0_i32_116 = arith.constant 0 : i32
    %c0_i32_117 = arith.constant 0 : i32
    %c0_i32_118 = arith.constant 0 : i32
    %131 = tpu.memref_slice %arg4[%c0_i32_115, %c0_i32_116, %c0_i32_117, %c0_i32_118] : memref<1x4x8x256xbf16, #tpu.memory_space<vmem>> -> memref<1x4x8x256xbf16, #tpu.memory_space<vmem>>
    %132 = tpu.memref_squeeze %131 : memref<1x4x8x256xbf16, #tpu.memory_space<vmem>> -> memref<4x8x256xbf16, #tpu.memory_space<vmem>>
    %c2 = arith.constant 2 : index
    %c0_119 = arith.constant 0 : index
    %c0_120 = arith.constant 0 : index
    %133 = vector.load %132[%c2, %c0_119, %c0_120] : memref<4x8x256xbf16, #tpu.memory_space<vmem>>, vector<1x8x256xbf16>
    %134 = vector.shape_cast %133 : vector<1x8x256xbf16> to vector<8x256xbf16>
    %135 = vector.shape_cast %130 : vector<8x256xbf16> to vector<1x8x256xbf16>
    tpu.vector_store %132[%c2, %c0_119, %c0_120], %135 {strides = array<i32>} : memref<4x8x256xbf16, #tpu.memory_space<vmem>>, vector<1x8x256xbf16>,
    %cst_121 = arith.constant dense<0.000000e+00> : vector<8xf32>
    %136 = vector.multi_reduction <add>, %129, %cst_121 [1] : vector<8x256xf32> to vector<8xf32>
    %137 = vector.shape_cast %136 : vector<8xf32> to vector<8x1xf32>
    %138 = arith.addf %94, %137 : vector<8x1xf32>
    %139 = arith.mulf %129, %129 : vector<8x256xf32>
    %cst_122 = arith.constant dense<0.000000e+00> : vector<8xf32>
    %140 = vector.multi_reduction <add>, %139, %cst_122 [1] : vector<8x256xf32> to vector<8xf32>
    %141 = vector.shape_cast %140 : vector<8xf32> to vector<8x1xf32>
    %142 = arith.addf %98, %141 : vector<8x1xf32>
    %cst_123 = arith.constant 0.000000e+00 : f32
    %143 = vector.broadcast %cst_123 : f32 to vector<4x256xf32>
    %144 = arith.maximumf %125, %143 : vector<4x256xf32>
    %145 = arith.truncf %144 : vector<4x256xf32> to vector<4x256xbf16>
    %cst_124 = arith.constant dense<0.000000e+00> : vector<8x256xf32>
    %146 = tpu.matmul %2, %145, %cst_124 {dimension_numbers = #tpu.dot_dimension_numbers<[1], [0], [0], [1], [0, 0, 1, 1], [], []>} : vector<8x4xbf16>, vector<4x256xbf16>, vector<8x256xf32> -> vector<8x256xf32>
    %147 = arith.truncf %146 : vector<8x256xf32> to vector<8x256xbf16>
    %c0_i32_125 = arith.constant 0 : i32
    %c0_i32_126 = arith.constant 0 : i32
    %c0_i32_127 = arith.constant 0 : i32
    %c0_i32_128 = arith.constant 0 : i32
    %148 = tpu.memref_slice %arg4[%c0_i32_125, %c0_i32_126, %c0_i32_127, %c0_i32_128] : memref<1x4x8x256xbf16, #tpu.memory_space<vmem>> -> memref<1x4x8x256xbf16, #tpu.memory_space<vmem>>
    %149 = tpu.memref_squeeze %148 : memref<1x4x8x256xbf16, #tpu.memory_space<vmem>> -> memref<4x8x256xbf16, #tpu.memory_space<vmem>>
    %c3 = arith.constant 3 : index
    %c0_129 = arith.constant 0 : index
    %c0_130 = arith.constant 0 : index
    %150 = vector.load %149[%c3, %c0_129, %c0_130] : memref<4x8x256xbf16, #tpu.memory_space<vmem>>, vector<1x8x256xbf16>
    %151 = vector.shape_cast %150 : vector<1x8x256xbf16> to vector<8x256xbf16>
    %152 = vector.shape_cast %147 : vector<8x256xbf16> to vector<1x8x256xbf16>
    tpu.vector_store %149[%c3, %c0_129, %c0_130], %152 {strides = array<i32>} : memref<4x8x256xbf16, #tpu.memory_space<vmem>>, vector<1x8x256xbf16>,
    %cst_131 = arith.constant dense<0.000000e+00> : vector<8xf32>
    %153 = vector.multi_reduction <add>, %146, %cst_131 [1] : vector<8x256xf32> to vector<8xf32>
    %154 = vector.shape_cast %153 : vector<8xf32> to vector<8x1xf32>
    %155 = arith.addf %138, %154 : vector<8x1xf32>
    %156 = arith.mulf %146, %146 : vector<8x256xf32>
    %cst_132 = arith.constant dense<0.000000e+00> : vector<8xf32>
    %157 = vector.multi_reduction <add>, %156, %cst_132 [1] : vector<8x256xf32> to vector<8xf32>
    %158 = vector.shape_cast %157 : vector<8xf32> to vector<8x1xf32>
    %159 = arith.addf %142, %158 : vector<8x1xf32>
    %c0_i32_133 = arith.constant 0 : i32
    %c0_i32_134 = arith.constant 0 : i32
    %c0_i32_135 = arith.constant 0 : i32
    %160 = tpu.memref_slice %arg5[%c0_i32_133, %c0_i32_134, %c0_i32_135] : memref<1x8x2xf32, #tpu.memory_space<vmem>> -> memref<1x8x2xf32, #tpu.memory_space<vmem>>
    %161 = tpu.memref_squeeze %160 : memref<1x8x2xf32, #tpu.memory_space<vmem>> -> memref<8x2xf32, #tpu.memory_space<vmem>>
    %c0_136 = arith.constant 0 : index
    %c0_137 = arith.constant 0 : index
    %162 = vector.load %161[%c0_136, %c0_137] : memref<8x2xf32, #tpu.memory_space<vmem>>, vector<8x1xf32>
    tpu.vector_store %161[%c0_136, %c0_137], %155 {strides = array<i32>} : memref<8x2xf32, #tpu.memory_space<vmem>>, vector<8x1xf32>,
    %c0_i32_138 = arith.constant 0 : i32
    %c0_i32_139 = arith.constant 0 : i32
    %c0_i32_140 = arith.constant 0 : i32
    %163 = tpu.memref_slice %arg5[%c0_i32_138, %c0_i32_139, %c0_i32_140] : memref<1x8x2xf32, #tpu.memory_space<vmem>> -> memref<1x8x2xf32, #tpu.memory_space<vmem>>
    %164 = tpu.memref_squeeze %163 : memref<1x8x2xf32, #tpu.memory_space<vmem>> -> memref<8x2xf32, #tpu.memory_space<vmem>>
    %c0_141 = arith.constant 0 : index
    %c1_142 = arith.constant 1 : index
    %165 = vector.load %164[%c0_141, %c1_142] : memref<8x2xf32, #tpu.memory_space<vmem>>, vector<8x1xf32>
    tpu.vector_store %164[%c0_141, %c1_142], %159 {strides = array<i32>} : memref<8x2xf32, #tpu.memory_space<vmem>>, vector<8x1xf32>,
    return
  }
  func.func @transform_0(%arg0: i32) -> (i32, i32, i32) {
    %c0_i32 = arith.constant 0 : i32
    %c0_i32_0 = arith.constant 0 : i32
    %c0_i32_1 = arith.constant 0 : i32
    return %arg0, %c0_i32, %c0_i32_0 : i32, i32, i32
  }
  func.func @transform_1(%arg0: i32) -> (i32, i32) {
    %c0_i32 = arith.constant 0 : i32
    %c0_i32_0 = arith.constant 0 : i32
    %c0_i32_1 = arith.constant 0 : i32
    return %c0_i32, %c0_i32_0 : i32, i32
  }
  func.func @transform_2(%arg0: i32) -> (i32, i32) {
    %c0_i32 = arith.constant 0 : i32
    %c0_i32_0 = arith.constant 0 : i32
    %c0_i32_1 = arith.constant 0 : i32
    return %c0_i32, %c0_i32_0 : i32, i32
  }
  func.func @transform_3(%arg0: i32) -> (i32, i32, i32, i32) {
    %c0_i32 = arith.constant 0 : i32
    %c0_i32_0 = arith.constant 0 : i32
    %c0_i32_1 = arith.constant 0 : i32
    %c0_i32_2 = arith.constant 0 : i32
    return %arg0, %c0_i32, %c0_i32_0, %c0_i32_1 : i32, i32, i32, i32
  }
  func.func @transform_4(%arg0: i32) -> (i32, i32, i32) {
    %c0_i32 = arith.constant 0 : i32
    %c0_i32_0 = arith.constant 0 : i32
    %c0_i32_1 = arith.constant 0 : i32
    return %arg0, %c0_i32, %c0_i32_0 : i32, i32, i32
  }
}

</mosaic_0001>

<llo_original>
// kernel: factorized_increase.1
$region0: #{factorized_increase.1}
  #allocation0 [shape = 'u32[]', space=smem, size = 0x4, offset = 0x4, fixed_abs, tag = 'smem constant byte address 0x4 - core index']
  #allocation1 [shape = 'u32[144,128]{1,0:T(1,128)}', space=vmem, size = 0x12000, scoped, tag = 'internal scratch']
  #allocation2 [shape = 'f32[4,256]{1,0:T(4,128)}', space=vmem, size = 0x1000, scoped, tag = 'scratch operand']
  #allocation3 [shape = 'f32[4,256]{1,0:T(4,128)}', space=vmem, size = 0x1000, scoped, tag = 'scratch operand']
  %s0 = inlined_call_operand.vmem [shape: f32[2,4,256], index: 0, kind: input, shape index: {}]
  %s1 = inlined_call_operand.vmem [shape: bf16[8,4], index: 1, kind: input, shape index: {}]
  %s2 = inlined_call_operand.vmem [shape: s32[1,256], index: 2, kind: input, shape index: {}]
  %s3 = inlined_call_operand.vmem [shape: bf16[2,4,8,256], index: 3, kind: output, shape index: {0}]
  %s4 = inlined_call_operand.vmem [shape: f32[2,8,2], index: 4, kind: output, shape index: {1}]
  %5 = xla_tuple %s3, %s4
  %s6 = sld [smem:[#allocation0]]
  $region53: #{factorized_increase.1} parent=0
    _
  %s8 = ssub.s32 1, %s6
  %s9 = scalar_select 0, %s8, %s6
  loop: start=0, step=1, limit=4
  $region2: #{factorized_increase.1} parent=0 // loop_pre_header
    _
  $region3: #{factorized_increase.1} parent=0 // loop_header
    %s11 = sphi 0, %s15
    %p12 = scmp.ge.s32.totalorder %s11, 4
    %s21 = sphi 0, %s23
    %s24 = sphi 0, %s21
    %s25 = sphi 0, %s24
    %s41 = sphi 0, %s25
    %s45 = sphi 0, %s45
    %s47 = sphi 0, %s45
    %s48 = sphi 0, %s47
    %s62 = sphi 0, %s48
    %s66 = sphi 0, %s66
    %s68 = sphi 0, %s66
    %s69 = sphi 0, %s68
    %s83 = sphi 0, %s69
    %s89 = sphi 0, %s91
    %s92 = sphi 0, %s89
    %s93 = sphi 0, %s92
    %s109 = sphi 0, %s93
    %s115 = sphi 0, %s117
    %s118 = sphi 0, %s115
    %s119 = sphi 0, %s118
    %s135 = sphi 0, %s119
  $region4: #{factorized_increase.1} parent=0 // loop_header_branch
    %14 = sbr.rel (%p12) target = $region8
  $region5: #{factorized_increase.1} parent=0 // loop_body
    %s16 = ssub.s32 %s11, 1
    %s17 = ssub.s32 %s11, 2
    %s18 = sadd.s32 %s11, 1
    %s19 = ssub.s32 %s11, %s18
    %p20 = scmp.eq.s32.totalorder %s19, 0
    %s22 = sadd.s32 %s21, 1
    %s23 = scalar_select %p20, %s21, %s22
    %p26 = pneg %p20
    %p27 = scmp.eq.s32.totalorder %s11, 1
    %p28 = por %p26, %p27
    %p29 = scmp.ne.s32.totalorder %s21, %s24
    %p30 = scmp.eq.s32.totalorder %s11, 0
    %p31 = por %p29, %p30
    %p32 = scmp.ne.s32.totalorder %s21, %s24
    %p33 = scmp.eq.s32.totalorder %s16, 1
    %p34 = por %p32, %p33
    %p35 = scmp.ne.s32.totalorder %s24, %s25
    %p36 = scmp.eq.s32.totalorder %s16, 0
    %p37 = por %p35, %p36
    %p38 = scmp.ne.s32.totalorder %s24, %s25
    %p39 = scmp.eq.s32.totalorder %s17, 1
    %p40 = por %p38, %p39
    %p42 = scmp.ne.s32.totalorder %s25, %s41
    %p43 = scmp.eq.s32.totalorder %s17, 0
    %p44 = por %p42, %p43
    %s46 = sadd.s32 %s45, 1
    %p49 = scmp.eq.s32.totalorder %s11, 1
    %p50 = scmp.ne.s32.totalorder %s45, %s47
    %p51 = scmp.eq.s32.totalorder %s11, 0
    %p52 = por %p50, %p51
    %p53 = scmp.ne.s32.totalorder %s45, %s47
    %p54 = scmp.eq.s32.totalorder %s16, 1
    %p55 = por %p53, %p54
    %p56 = scmp.ne.s32.totalorder %s47, %s48
    %p57 = scmp.eq.s32.totalorder %s16, 0
    %p58 = por %p56, %p57
    %p59 = scmp.ne.s32.totalorder %s47, %s48
    %p60 = scmp.eq.s32.totalorder %s17, 1
    %p61 = por %p59, %p60
    %p63 = scmp.ne.s32.totalorder %s48, %s62
    %p64 = scmp.eq.s32.totalorder %s17, 0
    %p65 = por %p63, %p64
    %s67 = sadd.s32 %s66, 1
    %p70 = scmp.eq.s32.totalorder %s11, 1
    %p71 = scmp.ne.s32.totalorder %s66, %s68
    %p72 = scmp.eq.s32.totalorder %s11, 0
    %p73 = por %p71, %p72
    %p74 = scmp.ne.s32.totalorder %s66, %s68
    %p75 = scmp.eq.s32.totalorder %s16, 1
    %p76 = por %p74, %p75
    %p77 = scmp.ne.s32.totalorder %s68, %s69
    %p78 = scmp.eq.s32.totalorder %s16, 0
    %p79 = por %p77, %p78
    %p80 = scmp.ne.s32.totalorder %s68, %s69
    %p81 = scmp.eq.s32.totalorder %s17, 1
    %p82 = por %p80, %p81
    %p84 = scmp.ne.s32.totalorder %s69, %s83
    %p85 = scmp.eq.s32.totalorder %s17, 0
    %p86 = por %p84, %p85
    %s87 = ssub.s32 %s11, %s18
    %p88 = scmp.eq.s32.totalorder %s87, 0
    %s90 = sadd.s32 %s89, 1
    %s91 = scalar_select %p88, %s89, %s90
    %p94 = pneg %p88
    %p95 = scmp.eq.s32.totalorder %s11, 1
    %p96 = por %p94, %p95
    %p97 = scmp.ne.s32.totalorder %s89, %s92
    %p98 = scmp.eq.s32.totalorder %s11, 0
    %p99 = por %p97, %p98
    %p100 = scmp.ne.s32.totalorder %s89, %s92
    %p101 = scmp.eq.s32.totalorder %s16, 1
    %p102 = por %p100, %p101
    %p103 = scmp.ne.s32.totalorder %s92, %s93
    %p104 = scmp.eq.s32.totalorder %s16, 0
    %p105 = por %p103, %p104
    %p106 = scmp.ne.s32.totalorder %s92, %s93
    %p107 = scmp.eq.s32.totalorder %s17, 1
    %p108 = por %p106, %p107
    %p110 = scmp.ne.s32.totalorder %s93, %s109
    %p111 = scmp.eq.s32.totalorder %s17, 0
    %p112 = por %p110, %p111
    %s113 = ssub.s32 %s11, %s18
    %p114 = scmp.eq.s32.totalorder %s113, 0
    %s116 = sadd.s32 %s115, 1
    %s117 = scalar_select %p114, %s115, %s116
    %p120 = pneg %p114
    %p121 = scmp.eq.s32.totalorder %s11, 1
    %p122 = por %p120, %p121
    %p123 = scmp.ne.s32.totalorder %s115, %s118
    %p124 = scmp.eq.s32.totalorder %s11, 0
    %p125 = por %p123, %p124
    %p126 = scmp.ne.s32.totalorder %s115, %s118
    %p127 = scmp.eq.s32.totalorder %s16, 1
    %p128 = por %p126, %p127
    %p129 = scmp.ne.s32.totalorder %s118, %s119
    %p130 = scmp.eq.s32.totalorder %s16, 0
    %p131 = por %p129, %p130
    %p132 = scmp.ne.s32.totalorder %s118, %s119
    %p133 = scmp.eq.s32.totalorder %s17, 1
    %p134 = por %p132, %p133
    %p136 = scmp.ne.s32.totalorder %s119, %s135
    %p137 = scmp.eq.s32.totalorder %s17, 0
    %p138 = por %p136, %p137
    %p139 = scmp.le.s32.totalorder 1, %s11
    %p140 = scmp.lt.s32.totalorder %s11, 3
    %p141 = pnand %p139, %p140
    %p142 = pneg %p141
    // Predicated region
    $region9: #{factorized_increase.1} parent=5 // pred_check
      _
    $region10: #{factorized_increase.1} parent=5 // pred_check_branch
      %144 = sbr.rel (%p141) target = $region12
    $region11: #{factorized_increase.1} parent=5 // pred_region
      %s145 = ssub.s32 %s11, 1
      // Predicated region
      $region13: #{factorized_increase.1} parent=11 // pred_check
        %p146 = pneg %p58
      $region14: #{factorized_increase.1} parent=11 // pred_check_branch
        %148 = sbr.rel (%p146) target = $region16
      $region15: #{factorized_increase.1} parent=11 // pred_region
        _
      $region16: #{factorized_increase.1} parent=11 // pred_fallthru
        _
      // Predicated region
      $region17: #{factorized_increase.1} parent=11 // pred_check
        %p149 = pneg %p79
      $region18: #{factorized_increase.1} parent=11 // pred_check_branch
        %151 = sbr.rel (%p149) target = $region20
      $region19: #{factorized_increase.1} parent=11 // pred_region
        _
      $region20: #{factorized_increase.1} parent=11 // pred_fallthru
        _
    $region12: #{factorized_increase.1} parent=5 // pred_fallthru
      _
    %p152 = scmp.lt.s32.totalorder %s11, 2
    // Predicated region
    $region21: #{factorized_increase.1} parent=5 // pred_check
      %p153 = pneg %p152
    $region22: #{factorized_increase.1} parent=5 // pred_check_branch
      %155 = sbr.rel (%p153) target = $region24
    $region23: #{factorized_increase.1} parent=5 // pred_region
      // Predicated region
      $region25: #{factorized_increase.1} parent=23 // pred_check
        %p156 = pneg %p31
      $region26: #{factorized_increase.1} parent=23 // pred_check_branch
        %158 = sbr.rel (%p156) target = $region28
      $region27: #{factorized_increase.1} parent=23 // pred_region
        %p159 = scmp.lt.s32.totalorder %s11, 1
        %s160 = scalar_select %p159, %s11, 1
        %s161 = smul.addr %s160, 2
        %s162 = smul.addr %s161, 4
        %s163 = scalar_lea.vmem %s0, %s162
      $region28: #{factorized_increase.1} parent=23 // pred_fallthru
        _
    $region24: #{factorized_increase.1} parent=5 // pred_fallthru
      _
    %p164 = scmp.le.s32.totalorder 1, %s11
    %p165 = scmp.lt.s32.totalorder %s11, 3
    %p166 = pnand %p164, %p165
    %p167 = pneg %p166
    // Predicated region
    $region29: #{factorized_increase.1} parent=5 // pred_check
      _
    $region30: #{factorized_increase.1} parent=5 // pred_check_branch
      %169 = sbr.rel (%p166) target = $region32
    $region31: #{factorized_increase.1} parent=5 // pred_region
      %s170 = ssub.s32 %s11, 1
      %p171 = scmp.lt.s32.totalorder %s16, 1
      %s172 = scalar_select %p171, %s16, 1
      %s173 = smul.addr %s172, 2
      %s174 = smul.addr %s173, 4
      %s175 = scalar_lea.vmem %s0, %s174
      %p176 = pneg %p37
      %p177 = pneg %p34
      %p178 = pneg %p58
      %p179 = pneg %p55
      %p180 = pneg %p79
      %p181 = pneg %p76
      %p182 = pneg %p105
      %p183 = pneg %p102
      %p184 = scmp.lt.s32.totalorder %s16, 1
      %s185 = scalar_select %p184, %s16, 1
      %s186 = smul.addr %s185, 8
      %s187 = smul.addr %s186, 4
      %s188 = scalar_lea.vmem %s3, %s187
      %p189 = pneg %p131
      %p190 = pneg %p128
      %p191 = scmp.lt.s32.totalorder %s16, 1
      %s192 = scalar_select %p191, %s16, 1
      %s193 = smul.addr %s192, 8
      %s194 = scalar_lea.vmem %s4, %s193
      %p195 = scmp.lt.s32.totalorder %s16, 1
      %s196 = scalar_select %p195, %s16, 1
      %s197 = smul.addr %s196, 2
      %s198 = smul.addr %s197, 4
      %s199 = scalar_lea.vmem %s0, %s198
      %p200 = scmp.lt.s32.totalorder %s16, 1
      %s201 = scalar_select %p200, %s16, 1
      %s202 = smul.addr %s201, 8
      %s203 = smul.addr %s202, 4
      %s204 = scalar_lea.vmem %s3, %s203
      %p205 = scmp.lt.s32.totalorder %s16, 1
      %s206 = scalar_select %p205, %s16, 1
      %s207 = smul.addr %s206, 8
      %s208 = scalar_lea.vmem %s4, %s207
      %v210 = vld [vmem:[%s199] sm:$0xff]
      %v211 = vld [vmem:[%s1] sm:$0xf]
      %v212 = vld [vmem:[%s2] sm:$0x3]
      %vm213 = vcmp.eq.s32.totalorder %v212, 0
      %vm214 = vcmp.eq.s32.totalorder %v212, 15
      %v215 = vld [vmem:[%s199] sm:$0xf]
      %vm216 = vcmask 125952
      %217 = vst.msk [vmem:[#allocation2] sm:$0xf] %vm216, %v215
      %v218 = vld [vmem:[%s199] sm:$0xff]
      %220 = vrot.lane.b32.xlu0 %v218, 16
      %v221 = vpop.permute.xlu0 %220
      %v222 = vrot.slane %v221, 4
      %vm223 = vcmask 130048
      %v224 = vsel %vm223, %v222, %v221
      %vm226 = vcmask 1043584
      %vm227 = vcmask 1047556
      %vm228 = vmor %vm227, %vm226
      %229 = vst.msk [vmem:[#allocation2] sm:$0xff] %vm228, %v224
      %v230 = vmul.f32 %v210, 0.75
      %v231 = vld [vmem:[#allocation2] sm:$0xff]
      %v232 = vmul.f32 %v231, 0.25
      %v233 = vadd.f32 %v230, %v232
      %v234 = vld [vmem:[%s199] sm:$0xff]
      %236 = vrot.lane.b32.xlu0 %v234, 112
      %v237 = vpop.permute.xlu0 %236
      %v238 = vrot.slane %v237, 4
      %vm239 = vcmask 916480
      %v240 = vsel %vm239, %v237, %v238
      %vm242 = vcmask 1043456
      %vm243 = vcmask 916484
      %vm244 = vmor %vm243, %vm242
      %245 = vst.msk [vmem:[#allocation2] sm:$0xff] %vm244, %v240
      %v246 = vld [vmem:[%s199 + $0x4] sm:$0xf]
      %vm247 = vcmask 1044352
      %248 = vst.msk [vmem:[#allocation2 + $0x4] sm:$0xf] %vm247, %v246
      %v249 = vld [vmem:[#allocation2] sm:$0xff]
      %v250 = vmul.f32 %v249, 0.25
      %v251 = vadd.f32 %v230, %v250
      %252 = vst [vmem:[#allocation3] sm:$0xff] %v233
      %v253 = vld [vmem:[#allocation3] sm:$0xff]
      %255 = vrot.lane.b32.xlu0 %v253, 1
      %v256 = vpop.permute.xlu0 %255
      %v257 = vrot.slane %v256, 4
      %vm258 = vcmask 7168
      %v259 = vsel %vm258, %v257, %v256
      %vm261 = vcmask 1043464
      %vm262 = vmor %vm227, %vm261
      %263 = vst.msk [vmem:[#allocation2] sm:$0xff] %vm262, %v259
      %v264 = vld [vmem:[#allocation3] sm:$0xf]
      %vm265 = vcmask 3072
      %266 = vst.msk [vmem:[#allocation2] sm:$0xf] %vm265, %v264
      %v267 = vld [vmem:[#allocation2] sm:$0xff]
      %v268 = vsel %vm213, 1, 0
      %v269 = vlaneseq
      %v270 = vshrl.u32 %v269, 7
      %v271 = vsub.s32 0, %v270
      %v272 = vrot.slane %v268, %v271
      %v273 = vlaneseq
      %v274 = vshrl.u32 %v273, 7
      %v275 = vsub.s32 1, %v274
      %v276 = vrot.slane %v268, %v275
      %vm277 = vcmp.eq.s32.totalorder %v272, 1
      %vm278 = vcmp.eq.s32.totalorder %v276, 1
      %v280 = vcombine.high %v233, %v233
      %v283 = vcombine.high %v267, %v267
      %v285 = vsel %vm277, %v233, %v267
      %v286 = vsel %vm278, %v280, %v283
      %v287 = vld [vmem:[#allocation3] sm:$0xff]
      %289 = vrot.lane.b32.xlu0 %v287, 127
      %v290 = vpop.permute.xlu0 %289
      %v291 = vrot.slane %v290, 4
      %vm292 = vcmask 1039360
      %v293 = vsel %vm292, %v290, %v291
      %vm295 = vcmask 1039364
      %vm296 = vmor %vm295, %vm242
      %297 = vst.msk [vmem:[#allocation2] sm:$0xff] %vm296, %v293
      %v298 = vld [vmem:[#allocation3 + $0x4] sm:$0xf]
      %vm299 = vcmask 1044472
      %300 = vst.msk [vmem:[#allocation2 + $0x4] sm:$0xf] %vm299, %v298
      %v301 = vld [vmem:[#allocation2] sm:$0xff]
      %v302 = vsel %vm214, 1, 0
      %v303 = vlaneseq
      %v304 = vshrl.u32 %v303, 7
      %v305 = vsub.s32 0, %v304
      %v306 = vrot.slane %v302, %v305
      %v307 = vlaneseq
      %v308 = vshrl.u32 %v307, 7
      %v309 = vsub.s32 1, %v308
      %v310 = vrot.slane %v302, %v309
      %vm311 = vcmp.eq.s32.totalorder %v306, 1
      %vm312 = vcmp.eq.s32.totalorder %v310, 1
      %v314 = vcombine.high %v301, %v301
      %v316 = vsel %vm311, %v233, %v301
      %v317 = vsel %vm312, %v280, %v314
      %v318 = vmul.f32 %v233, 0.75
      %v319 = vmul.f32 %v285, 0.25
      %v320 = vmul.f32 %v286, 0.25
      %v323 = vcombine.low %v319, %v320
      %v325 = vadd.f32 %v318, %v323
      %v326 = vmul.f32 %v316, 0.25
      %v327 = vmul.f32 %v317, 0.25
      %v330 = vcombine.low %v326, %v327
      %v332 = vadd.f32 %v318, %v330
      %v333 = vmax.f32 %v325, 0.0
      %v335 = vcombine.high %v333, %v333
      %v337 = vpack.c.bf16 %v333, %v333
      %v338 = vpack.c.bf16 %v335, %v335
      %vm339 = vcmask 31744
      %v341 = vsel %vm339, %v211, 0
      %vm343 = vcmask 1041408
      %v345 = vsel %vm343, %v337, 0
      %v348 = vsel %vm343, %v338, 0
      %350 = vmatprep.subr.bf16.mxu0 %v348
      %351 = vmatpush1.bf16.msra.mxu0 %v345
      %352 = vmatprep.subr.bf16.mxu0 0
      %353 = vmatpush1.bf16.msra.mxu0 0
      %354 = vmatprep.subr.bf16.mxu0 0
      %355 = vmatpush1.bf16.msra.mxu0 0
      %356 = vmatprep.subr.bf16.mxu0 0
      %357 = vmatpush1.bf16.msra.mxu0 0
      %358 = vmatprep.subr.bf16.mxu0 0
      %359 = vmatpush1.bf16.msra.mxu0 0
      %360 = vmatprep.subr.bf16.mxu0 0
      %361 = vmatpush1.bf16.msra.mxu0 0
      %362 = vmatprep.subr.bf16.mxu0 0
      %363 = vmatpush1.bf16.msra.mxu0 0
      %364 = vmatprep.subr.bf16.mxu0 0
      %365 = vmatpush1.bf16.msra.mxu0 0
      %366 = vmatprep.subr.bf16.mxu0 0
      %367 = vmatpush1.bf16.msra.mxu0 0
      %368 = vmatprep.subr.bf16.mxu0 0
      %369 = vmatpush1.bf16.msra.mxu0 0
      %370 = vmatprep.subr.bf16.mxu0 0
      %371 = vmatpush1.bf16.msra.mxu0 0
      %372 = vmatprep.subr.bf16.mxu0 0
      %373 = vmatpush1.bf16.msra.mxu0 0
      %374 = vmatprep.subr.bf16.mxu0 0
      %375 = vmatpush1.bf16.msra.mxu0 0
      %376 = vmatprep.subr.bf16.mxu0 0
      %377 = vmatpush1.bf16.msra.mxu0 0
      %378 = vmatprep.subr.bf16.mxu0 0
      %379 = vmatpush1.bf16.msra.mxu0 0
      %380 = vmatprep.subr.bf16.mxu0 0
      %381 = vmatpush1.bf16.msra.mxu0 0
      %382 = vmatprep.mubr.bf16.mxu0 0
      %383 = vmatmul.mubr.bf16.gmra.mrb[0].mxu0 %v341
      %v384 = vpop.f32.mrb[0].mxu0
      %v385 = vadd.f32 0.0, %v384
      %v386 = vpop.f32.mrb[0].mxu0
      %v387 = vadd.f32 0.0, %v386
      %v388 = vpop.f32.mrb[0].mxu0
      %v389 = vpop.f32.mrb[0].mxu0
      %390 = vdwg.mxu0
      %v391 = vpack.c.bf16 %v385, %v385
      %v392 = vpack.c.bf16 %v387, %v387
      %v395 = vunpack.c.l.b16 %v391
      %v396 = vunpack.c.l.b16 %v392
      %v397 = vpack.c.b16 %v396, %v395
      %399 = vst [vmem:[%s204] sm:$0xff] %v397
      %v400 = vadd.f32 %v385, %v387
      %401 = vadd.xlane.f32.xlu0 %v400
      %v402 = vpop.xlane.xlu0 %401
      %v403 = vadd.f32 %v402, 0.0
      %v404 = vmul.f32 %v385, %v385
      %v405 = vmul.f32 %v387, %v387
      %v406 = vadd.f32 %v404, %v405
      %407 = vadd.xlane.f32.xlu0 %v406
      %v408 = vpop.xlane.xlu0 %407
      %v409 = vadd.f32 %v408, 0.0
      %v410 = vmax.f32 %v332, 0.0
      %v412 = vcombine.high %v410, %v410
      %v414 = vpack.c.bf16 %v410, %v410
      %v415 = vpack.c.bf16 %v412, %v412
      %v417 = vsel %vm343, %v414, 0
      %v420 = vsel %vm343, %v415, 0
      %422 = vmatprep.subr.bf16.mxu0 %v420
      %423 = vmatpush1.bf16.msra.mxu0 %v417
      %424 = vmatprep.subr.bf16.mxu0 0
      %425 = vmatpush1.bf16.msra.mxu0 0
      %426 = vmatprep.subr.bf16.mxu0 0
      %427 = vmatpush1.bf16.msra.mxu0 0
      %428 = vmatprep.subr.bf16.mxu0 0
      %429 = vmatpush1.bf16.msra.mxu0 0
      %430 = vmatprep.subr.bf16.mxu0 0
      %431 = vmatpush1.bf16.msra.mxu0 0
      %432 = vmatprep.subr.bf16.mxu0 0
      %433 = vmatpush1.bf16.msra.mxu0 0
      %434 = vmatprep.subr.bf16.mxu0 0
      %435 = vmatpush1.bf16.msra.mxu0 0
      %436 = vmatprep.subr.bf16.mxu0 0
      %437 = vmatpush1.bf16.msra.mxu0 0
      %438 = vmatprep.subr.bf16.mxu0 0
      %439 = vmatpush1.bf16.msra.mxu0 0
      %440 = vmatprep.subr.bf16.mxu0 0
      %441 = vmatpush1.bf16.msra.mxu0 0
      %442 = vmatprep.subr.bf16.mxu0 0
      %443 = vmatpush1.bf16.msra.mxu0 0
      %444 = vmatprep.subr.bf16.mxu0 0
      %445 = vmatpush1.bf16.msra.mxu0 0
      %446 = vmatprep.subr.bf16.mxu0 0
      %447 = vmatpush1.bf16.msra.mxu0 0
      %448 = vmatprep.subr.bf16.mxu0 0
      %449 = vmatpush1.bf16.msra.mxu0 0
      %450 = vmatprep.subr.bf16.mxu0 0
      %451 = vmatpush1.bf16.msra.mxu0 0
      %452 = vmatprep.subr.bf16.mxu0 0
      %453 = vmatpush1.bf16.msra.mxu0 0
      %454 = vmatprep.mubr.bf16.mxu0 0
      %455 = vmatmul.mubr.bf16.gmra.mrb[0].mxu0 %v341
      %v456 = vpop.f32.mrb[0].mxu0
      %v457 = vadd.f32 0.0, %v456
      %v458 = vpop.f32.mrb[0].mxu0
      %v459 = vadd.f32 0.0, %v458
      %v460 = vpop.f32.mrb[0].mxu0
      %v461 = vpop.f32.mrb[0].mxu0
      %462 = vdwg.mxu0
      %v463 = vpack.c.bf16 %v457, %v457
      %v464 = vpack.c.bf16 %v459, %v459
      %v467 = vunpack.c.l.b16 %v463
      %v468 = vunpack.c.l.b16 %v464
      %v469 = vpack.c.b16 %v468, %v467
      %s471 = scalar_lea.vmem %s204, 8
      %472 = vst [vmem:[%s471] sm:$0xff] %v469
      %v473 = vadd.f32 %v457, %v459
      %474 = vadd.xlane.f32.xlu0 %v473
      %v475 = vpop.xlane.xlu0 %474
      %v476 = vadd.f32 %v403, %v475
      %v477 = vmul.f32 %v457, %v457
      %v478 = vmul.f32 %v459, %v459
      %v479 = vadd.f32 %v477, %v478
      %480 = vadd.xlane.f32.xlu0 %v479
      %v481 = vpop.xlane.xlu0 %480
      %v482 = vadd.f32 %v409, %v481
      %483 = vst [vmem:[#allocation3] sm:$0xff] %v251
      %v484 = vld [vmem:[#allocation3] sm:$0xff]
      %486 = vrot.lane.b32.xlu0 %v484, 1
      %v487 = vpop.permute.xlu0 %486
      %v488 = vrot.slane %v487, 4
      %v489 = vsel %vm258, %v488, %v487
      %491 = vst.msk [vmem:[#allocation2] sm:$0xff] %vm262, %v489
      %v492 = vld [vmem:[#allocation3] sm:$0xf]
      %493 = vst.msk [vmem:[#allocation2] sm:$0xf] %vm265, %v492
      %v494 = vld [vmem:[#allocation2] sm:$0xff]
      %v496 = vcombine.high %v251, %v251
      %v499 = vcombine.high %v494, %v494
      %v501 = vsel %vm277, %v251, %v494
      %v502 = vsel %vm278, %v496, %v499
      %v503 = vld [vmem:[#allocation3] sm:$0xff]
      %505 = vrot.lane.b32.xlu0 %v503, 127
      %v506 = vpop.permute.xlu0 %505
      %v507 = vrot.slane %v506, 4
      %v508 = vsel %vm292, %v506, %v507
      %510 = vst.msk [vmem:[#allocation2] sm:$0xff] %vm296, %v508
      %v511 = vld [vmem:[#allocation3 + $0x4] sm:$0xf]
      %512 = vst.msk [vmem:[#allocation2 + $0x4] sm:$0xf] %vm299, %v511
      %v513 = vld [vmem:[#allocation2] sm:$0xff]
      %v515 = vcombine.high %v513, %v513
      %v517 = vsel %vm311, %v251, %v513
      %v518 = vsel %vm312, %v496, %v515
      %v519 = vmul.f32 %v251, 0.75
      %v520 = vmul.f32 %v501, 0.25
      %v521 = vmul.f32 %v502, 0.25
      %v524 = vcombine.low %v520, %v521
      %v526 = vadd.f32 %v519, %v524
      %v527 = vmul.f32 %v517, 0.25
      %v528 = vmul.f32 %v518, 0.25
      %v531 = vcombine.low %v527, %v528
      %v533 = vadd.f32 %v519, %v531
      %v534 = vmax.f32 %v526, 0.0
      %v536 = vcombine.high %v534, %v534
      %v538 = vpack.c.bf16 %v534, %v534
      %v539 = vpack.c.bf16 %v536, %v536
      %v541 = vsel %vm343, %v538, 0
      %v544 = vsel %vm343, %v539, 0
      %546 = vmatprep.subr.bf16.mxu0 %v544
      %547 = vmatpush1.bf16.msra.mxu0 %v541
      %548 = vmatprep.subr.bf16.mxu0 0
      %549 = vmatpush1.bf16.msra.mxu0 0
      %550 = vmatprep.subr.bf16.mxu0 0
      %551 = vmatpush1.bf16.msra.mxu0 0
      %552 = vmatprep.subr.bf16.mxu0 0
      %553 = vmatpush1.bf16.msra.mxu0 0
      %554 = vmatprep.subr.bf16.mxu0 0
      %555 = vmatpush1.bf16.msra.mxu0 0
      %556 = vmatprep.subr.bf16.mxu0 0
      %557 = vmatpush1.bf16.msra.mxu0 0
      %558 = vmatprep.subr.bf16.mxu0 0
      %559 = vmatpush1.bf16.msra.mxu0 0
      %560 = vmatprep.subr.bf16.mxu0 0
      %561 = vmatpush1.bf16.msra.mxu0 0
      %562 = vmatprep.subr.bf16.mxu0 0
      %563 = vmatpush1.bf16.msra.mxu0 0
      %564 = vmatprep.subr.bf16.mxu0 0
      %565 = vmatpush1.bf16.msra.mxu0 0
      %566 = vmatprep.subr.bf16.mxu0 0
      %567 = vmatpush1.bf16.msra.mxu0 0
      %568 = vmatprep.subr.bf16.mxu0 0
      %569 = vmatpush1.bf16.msra.mxu0 0
      %570 = vmatprep.subr.bf16.mxu0 0
      %571 = vmatpush1.bf16.msra.mxu0 0
      %572 = vmatprep.subr.bf16.mxu0 0
      %573 = vmatpush1.bf16.msra.mxu0 0
      %574 = vmatprep.subr.bf16.mxu0 0
      %575 = vmatpush1.bf16.msra.mxu0 0
      %576 = vmatprep.subr.bf16.mxu0 0
      %577 = vmatpush1.bf16.msra.mxu0 0
      %578 = vmatprep.mubr.bf16.mxu0 0
      %579 = vmatmul.mubr.bf16.gmra.mrb[0].mxu0 %v341
      %v580 = vpop.f32.mrb[0].mxu0
      %v581 = vadd.f32 0.0, %v580
      %v582 = vpop.f32.mrb[0].mxu0
      %v583 = vadd.f32 0.0, %v582
      %v584 = vpop.f32.mrb[0].mxu0
      %v585 = vpop.f32.mrb[0].mxu0
      %586 = vdwg.mxu0
      %v587 = vpack.c.bf16 %v581, %v581
      %v588 = vpack.c.bf16 %v583, %v583
      %v591 = vunpack.c.l.b16 %v587
      %v592 = vunpack.c.l.b16 %v588
      %v593 = vpack.c.b16 %v592, %v591
      %s595 = scalar_lea.vmem %s204, 16
      %596 = vst [vmem:[%s595] sm:$0xff] %v593
      %v597 = vadd.f32 %v581, %v583
      %598 = vadd.xlane.f32.xlu0 %v597
      %v599 = vpop.xlane.xlu0 %598
      %v600 = vadd.f32 %v476, %v599
      %v601 = vmul.f32 %v581, %v581
      %v602 = vmul.f32 %v583, %v583
      %v603 = vadd.f32 %v601, %v602
      %604 = vadd.xlane.f32.xlu0 %v603
      %v605 = vpop.xlane.xlu0 %604
      %v606 = vadd.f32 %v482, %v605
      %v607 = vmax.f32 %v533, 0.0
      %v609 = vcombine.high %v607, %v607
      %v611 = vpack.c.bf16 %v607, %v607
      %v612 = vpack.c.bf16 %v609, %v609
      %v614 = vsel %vm343, %v611, 0
      %v617 = vsel %vm343, %v612, 0
      %619 = vmatprep.subr.bf16.mxu0 %v617
      %620 = vmatpush1.bf16.msra.mxu0 %v614
      %621 = vmatprep.subr.bf16.mxu0 0
      %622 = vmatpush1.bf16.msra.mxu0 0
      %623 = vmatprep.subr.bf16.mxu0 0
      %624 = vmatpush1.bf16.msra.mxu0 0
      %625 = vmatprep.subr.bf16.mxu0 0
      %626 = vmatpush1.bf16.msra.mxu0 0
      %627 = vmatprep.subr.bf16.mxu0 0
      %628 = vmatpush1.bf16.msra.mxu0 0
      %629 = vmatprep.subr.bf16.mxu0 0
      %630 = vmatpush1.bf16.msra.mxu0 0
      %631 = vmatprep.subr.bf16.mxu0 0
      %632 = vmatpush1.bf16.msra.mxu0 0
      %633 = vmatprep.subr.bf16.mxu0 0
      %634 = vmatpush1.bf16.msra.mxu0 0
      %635 = vmatprep.subr.bf16.mxu0 0
      %636 = vmatpush1.bf16.msra.mxu0 0
      %637 = vmatprep.subr.bf16.mxu0 0
      %638 = vmatpush1.bf16.msra.mxu0 0
      %639 = vmatprep.subr.bf16.mxu0 0
      %640 = vmatpush1.bf16.msra.mxu0 0
      %641 = vmatprep.subr.bf16.mxu0 0
      %642 = vmatpush1.bf16.msra.mxu0 0
      %643 = vmatprep.subr.bf16.mxu0 0
      %644 = vmatpush1.bf16.msra.mxu0 0
      %645 = vmatprep.subr.bf16.mxu0 0
      %646 = vmatpush1.bf16.msra.mxu0 0
      %647 = vmatprep.subr.bf16.mxu0 0
      %648 = vmatpush1.bf16.msra.mxu0 0
      %649 = vmatprep.subr.bf16.mxu0 0
      %650 = vmatpush1.bf16.msra.mxu0 0
      %651 = vmatprep.mubr.bf16.mxu0 0
      %652 = vmatmul.mubr.bf16.gmra.mrb[0].mxu0 %v341
      %v653 = vpop.f32.mrb[0].mxu0
      %v654 = vadd.f32 0.0, %v653
      %v655 = vpop.f32.mrb[0].mxu0
      %v656 = vadd.f32 0.0, %v655
      %v657 = vpop.f32.mrb[0].mxu0
      %v658 = vpop.f32.mrb[0].mxu0
      %659 = vdwg.mxu0
      %v660 = vpack.c.bf16 %v654, %v654
      %v661 = vpack.c.bf16 %v656, %v656
      %v664 = vunpack.c.l.b16 %v660
      %v665 = vunpack.c.l.b16 %v661
      %v666 = vpack.c.b16 %v665, %v664
      %s668 = scalar_lea.vmem %s204, 24
      %669 = vst [vmem:[%s668] sm:$0xff] %v666
      %v670 = vadd.f32 %v654, %v656
      %671 = vadd.xlane.f32.xlu0 %v670
      %v672 = vpop.xlane.xlu0 %671
      %v673 = vadd.f32 %v600, %v672
      %v674 = vmul.f32 %v654, %v654
      %v675 = vmul.f32 %v656, %v656
      %v676 = vadd.f32 %v674, %v675
      %677 = vadd.xlane.f32.xlu0 %v676
      %v678 = vpop.xlane.xlu0 %677
      %v679 = vadd.f32 %v606, %v678
      %680 = vst.msk [vmem:[%s208] sm:$0xff] %vm258, %v673
      %vm681 = vcmask 15368
      %682 = vst.msk [vmem:[%s208] sm:$0xff] %vm681, %v679
      %p683 = scmp.lt.s32.totalorder %s16, 1
      %s684 = scalar_select %p683, %s16, 1
      %s685 = smul.addr %s684, 8
      %s686 = smul.addr %s685, 4
      %s687 = scalar_lea.vmem %s3, %s686
      %p688 = scmp.lt.s32.totalorder %s16, 1
      %s689 = scalar_select %p688, %s16, 1
      %s690 = smul.addr %s689, 8
      %s691 = scalar_lea.vmem %s4, %s690
      // Predicated region
      $region33: #{factorized_increase.1} parent=31 // pred_check
        %p692 = pneg %p102
      $region34: #{factorized_increase.1} parent=31 // pred_check_branch
        %694 = sbr.rel (%p692) target = $region36
      $region35: #{factorized_increase.1} parent=31 // pred_region
        _
      $region36: #{factorized_increase.1} parent=31 // pred_fallthru
        _
      // Predicated region
      $region37: #{factorized_increase.1} parent=31 // pred_check
        %p695 = pneg %p128
      $region38: #{factorized_increase.1} parent=31 // pred_check_branch
        %697 = sbr.rel (%p695) target = $region40
      $region39: #{factorized_increase.1} parent=31 // pred_region
        _
      $region40: #{factorized_increase.1} parent=31 // pred_fallthru
        _
    $region32: #{factorized_increase.1} parent=5 // pred_fallthru
      _
    %p698 = scmp.le.s32.totalorder 2, %s11
    // Predicated region
    $region41: #{factorized_increase.1} parent=5 // pred_check
      %p699 = pneg %p698
    $region42: #{factorized_increase.1} parent=5 // pred_check_branch
      %701 = sbr.rel (%p699) target = $region44
    $region43: #{factorized_increase.1} parent=5 // pred_region
      %s702 = ssub.s32 %s11, 2
      // Predicated region
      $region45: #{factorized_increase.1} parent=43 // pred_check
        %p703 = pneg %p108
      $region46: #{factorized_increase.1} parent=43 // pred_check_branch
        %705 = sbr.rel (%p703) target = $region48
      $region47: #{factorized_increase.1} parent=43 // pred_region
        %p706 = scmp.lt.s32.totalorder %s17, 1
        %s707 = scalar_select %p706, %s17, 1
        %s708 = smul.addr %s707, 8
        %s709 = smul.addr %s708, 4
        %s710 = scalar_lea.vmem %s3, %s709
      $region48: #{factorized_increase.1} parent=43 // pred_fallthru
        _
      // Predicated region
      $region49: #{factorized_increase.1} parent=43 // pred_check
        %p711 = pneg %p134
      $region50: #{factorized_increase.1} parent=43 // pred_check_branch
        %713 = sbr.rel (%p711) target = $region52
      $region51: #{factorized_increase.1} parent=43 // pred_region
        %p714 = scmp.lt.s32.totalorder %s17, 1
        %s715 = scalar_select %p714, %s17, 1
        %s716 = smul.addr %s715, 8
        %s717 = scalar_lea.vmem %s4, %s716
      $region52: #{factorized_increase.1} parent=43 // pred_fallthru
        _
    $region44: #{factorized_increase.1} parent=5 // pred_fallthru
      _
  $region6: #{factorized_increase.1} parent=0 // loop_footer
    %s15 = sadd.s32 1, %s11
  $region7: #{factorized_increase.1} parent=0 // loop_footer_branch
    %10 = sbr.rel target = $region3
  $region8: #{factorized_increase.1} parent=0 // loop_exit
    _

</llo_original>
